<compile_context>
chip_gen: v5e
topology: v5e:2x2
jax: 0.10.0
libtpu: 0.0.40
codegen_flags: <defaults>
</compile_context>

<pallas_src>
import jax
import jax.numpy as jnp
from jax.experimental import pallas as pl
from jax.experimental.pallas import tpu as pltpu


NEG_SLOPE = 0.01  # F.leaky_relu default negative_slope


def _round_up(n, m):
    return ((n + m - 1) // m) * m


def _ann_kernel(x_ref, *w_and_out_refs):
    """Fused forward: (leaky_relu(x @ W0) @ W1 ...) @ W_last, all in VMEM.

    x_ref:   (tm, d_in_p)           padded input tile (lane-dense)
    w refs:  (d_i_p, d_{i+1}_p)     full padded (pre-transposed) weights
    out_ref: (tm, d_out_p)          padded output tile (lane-dense)
    """
    w_refs = w_and_out_refs[:-1]
    out_ref = w_and_out_refs[-1]

    h = x_ref[...]
    n_layers = len(w_refs)
    for i, w_ref in enumerate(w_refs):
        # Cast lhs to the weight dtype (f32 or bf16); accumulate in f32 on MXU.
        lhs = h.astype(w_ref.dtype)
        h = jnp.dot(lhs, w_ref[...], preferred_element_type=jnp.float32)
        if i < n_layers - 1:  # leaky_relu on all but the last layer
            h = jnp.where(h > 0, h, NEG_SLOPE * h)
    out_ref[...] = h.astype(out_ref.dtype)


def prepare_weights(weights, *, use_bf16=False):
    """Transpose nn.Linear weights (out,in)->(in,out) and zero-pad both dims
    up to multiples of 128.  Call ONCE per model, not per forward call."""
    dtype = jnp.bfloat16 if use_bf16 else jnp.float32
    prepped = []
    for w in weights:
        wt = jnp.asarray(w, jnp.float32).T                    # (in, out)
        kin, kout = wt.shape
        kin_p, kout_p = _round_up(kin, 128), _round_up(kout, 128)
        wt_p = jnp.zeros((kin_p, kout_p), jnp.float32).at[:kin, :kout].set(wt)
        prepped.append(wt_p.astype(dtype))
    return prepped


def ann_forward(x, w_prepped, d_out, *, tm=None):
    """x: [batch, d_in] float-ish.  w_prepped: output of prepare_weights().
    d_out: true (unpadded) output feature count.  Returns [batch, d_out] f32."""
    batch, d_in = x.shape
    d_in_p = w_prepped[0].shape[0]
    d_out_p = w_prepped[-1].shape[1]
    assert d_in <= d_in_p, "input feature dim larger than prepared weights"

    # Batch tile: whole batch (grid=(1,)) when small; otherwise 256-row tiles
    # (multiple of 128 so v5e/v6e/v7x MXU rows are filled).
    if tm is None:
        tm = _round_up(batch, 8) if batch <= 512 else 256
    batch_p = _round_up(batch, tm)

    # Pad the input: batch -> batch_p rows, features -> lane-dense d_in_p.
    x_p = jnp.zeros((batch_p, d_in_p), jnp.float32).at[:batch, :d_in].set(
        x.astype(jnp.float32))

    grid = (batch_p // tm,)

    in_specs = [pl.BlockSpec((tm, d_in_p), lambda i: (i, 0))]
    # Full (untiled) weights, resident in VMEM: same block every grid step.
    # TODO(synk): for large weights on multi-step grids, single-buffer them
    # (pipeline_mode=pl.Buffered(1)) to halve resident weight VMEM on v7x.
    for wp in w_prepped:
        in_specs.append(pl.BlockSpec(wp.shape, lambda i: (0, 0)))

    out_spec = pl.BlockSpec((tm, d_out_p), lambda i: (i, 0))

    # Advisory cost estimate so XLA schedules surrounding ops around us.
    flops = 2 * batch_p * sum(w.shape[0] * w.shape[1] for w in w_prepped)
    bytes_accessed = (x_p.size * x_p.dtype.itemsize
                      + sum(w.size * w.dtype.itemsize for w in w_prepped)
                      + batch_p * d_out_p * 4)
    cost = pl.CostEstimate(flops=flops, transcendentals=0,
                           bytes_accessed=bytes_accessed)

    # Explicit VMEM budget: x/out tiles and weights are double-buffered by
    # BlockSpec; keep headroom, and stay within v7x's 64 MiB physical VMEM.
    need = (2 * (tm * d_in_p + tm * d_out_p) * 4
            + 2 * sum(w.size * w.dtype.itemsize for w in w_prepped))
    vmem_limit = min(max(2 * need, 32 * 1024 * 1024), 64 * 1024 * 1024)

    fn = pl.pallas_call(
        _ann_kernel,
        out_shape=jax.ShapeDtypeStruct((batch_p, d_out_p), jnp.float32),
        grid_spec=pltpu.PrefetchScalarGridSpec(
            num_scalar_prefetch=0,
            grid=grid,
            in_specs=in_specs,
            out_specs=out_spec,
        ),
        compiler_params=pltpu.CompilerParams(
            dimension_semantics=("parallel",),
            vmem_limit_bytes=vmem_limit,
        ),
        cost_estimate=cost,
    )
    out_p = fn(x_p, *w_prepped)
    return out_p[:batch, :d_out]


def make_weights(size, key):
    """Deterministic synthetic weights with nn.Linear shape (out_features, in_features)."""
    weights = []
    for i in range(1, len(size)):
        key, sub = jax.random.split(key)
        fan_in = size[i - 1]
        bound = 1.0 / (fan_in ** 0.5)  # matches nn.Linear's uniform init range
        w = jax.random.uniform(sub, (size[i], size[i - 1]), jnp.float32,
                               minval=-bound, maxval=bound)
        weights.append(w)
    return weights


def ann_reference(x, weights):
    """Pure-JAX reference mirroring the PyTorch forward (f32)."""
    h = x
    for i, w in enumerate(weights):
        h = h @ w.T
        if i < len(weights) - 1:
            h = jnp.where(h > 0, h, NEG_SLOPE * h)
    return h


if __name__ == "__main__":
    # size[] analogous to the torch module constructor: ANN(size=[32, 64, 48, 16])
    size = [32, 64, 48, 16]
    batch = 16

    key = jax.random.PRNGKey(0)
    k_x, k_w = jax.random.split(key)
    x = jax.random.normal(k_x, (batch, size[0]), jnp.float32)
    weights = make_weights(size, k_w)

    # Weight prep (transpose + 128-lane zero padding) happens ONCE per model.
    w_prepped = prepare_weights(weights, use_bf16=False)

    out = ann_forward(x, w_prepped, d_out=size[-1])
    out = jax.block_until_ready(out)

    ref = ann_reference(x, weights)
    assert out.shape == (batch, size[-1])
    assert jnp.allclose(out, ref, atol=1e-4, rtol=1e-4), "mismatch vs reference"

    print("KERNEL_OK")
</pallas_src>

<mosaic_0001>
module attributes {stable_mosaic.version = 11 : i64} {
  func.func @_ann_kernel(%arg0: i32, %arg1: memref<16x128xf32, #tpu.memory_space<vmem>>, %arg2: memref<128x128xf32, #tpu.memory_space<vmem>>, %arg3: memref<128x128xf32, #tpu.memory_space<vmem>>, %arg4: memref<128x128xf32, #tpu.memory_space<vmem>>, %arg5: memref<16x128xf32, #tpu.memory_space<vmem>>) attributes {dimension_semantics = [#tpu.dimension_semantics<parallel>], iteration_bounds = array<i64: 1>, scalar_prefetch = 0 : i64, scratch_operands = 0 : i64, tpu.core_type = #tpu.core_type<tc>, window_params = [{transform_indices = @transform_0, window_bounds = array<i64: 16, 128>}, {pipeline_mode = #tpu.pipeline_mode<synchronous>, transform_indices = @transform_1, window_bounds = array<i64: 128, 128>}, {pipeline_mode = #tpu.pipeline_mode<synchronous>, transform_indices = @transform_2, window_bounds = array<i64: 128, 128>}, {pipeline_mode = #tpu.pipeline_mode<synchronous>, transform_indices = @transform_3, window_bounds = array<i64: 128, 128>}, {transform_indices = @transform_4, window_bounds = array<i64: 16, 128>}]} {
    %c0 = arith.constant 0 : index
    %c0_0 = arith.constant 0 : index
    %0 = vector.load %arg1[%c0, %c0_0] : memref<16x128xf32, #tpu.memory_space<vmem>>, vector<16x128xf32>
    %c0_1 = arith.constant 0 : index
    %c0_2 = arith.constant 0 : index
    %1 = vector.load %arg2[%c0_1, %c0_2] : memref<128x128xf32, #tpu.memory_space<vmem>>, vector<128x128xf32>
    %cst = arith.constant dense<0.000000e+00> : vector<16x128xf32>
    %2 = tpu.matmul %0, %1, %cst {dimension_numbers = #tpu.dot_dimension_numbers<[1], [0], [0], [1], [0, 0, 1, 1], [], []>} : vector<16x128xf32>, vector<128x128xf32>, vector<16x128xf32> -> vector<16x128xf32>
    %cst_3 = arith.constant 0.000000e+00 : f32
    %3 = vector.broadcast %cst_3 : f32 to vector<16x128xf32>
    %4 = arith.cmpf ogt, %2, %3 : vector<16x128xf32>
    %cst_4 = arith.constant 0.00999999977 : f32
    %5 = vector.broadcast %cst_4 : f32 to vector<16x128xf32>
    %6 = arith.mulf %5, %2 : vector<16x128xf32>
    %7 = arith.select %4, %2, %6 : vector<16x128xi1>, vector<16x128xf32>
    %c0_5 = arith.constant 0 : index
    %c0_6 = arith.constant 0 : index
    %8 = vector.load %arg3[%c0_5, %c0_6] : memref<128x128xf32, #tpu.memory_space<vmem>>, vector<128x128xf32>
    %cst_7 = arith.constant dense<0.000000e+00> : vector<16x128xf32>
    %9 = tpu.matmul %7, %8, %cst_7 {dimension_numbers = #tpu.dot_dimension_numbers<[1], [0], [0], [1], [0, 0, 1, 1], [], []>} : vector<16x128xf32>, vector<128x128xf32>, vector<16x128xf32> -> vector<16x128xf32>
    %cst_8 = arith.constant 0.000000e+00 : f32
    %10 = vector.broadcast %cst_8 : f32 to vector<16x128xf32>
    %11 = arith.cmpf ogt, %9, %10 : vector<16x128xf32>
    %cst_9 = arith.constant 0.00999999977 : f32
    %12 = vector.broadcast %cst_9 : f32 to vector<16x128xf32>
    %13 = arith.mulf %12, %9 : vector<16x128xf32>
    %14 = arith.select %11, %9, %13 : vector<16x128xi1>, vector<16x128xf32>
    %c0_10 = arith.constant 0 : index
    %c0_11 = arith.constant 0 : index
    %15 = vector.load %arg4[%c0_10, %c0_11] : memref<128x128xf32, #tpu.memory_space<vmem>>, vector<128x128xf32>
    %cst_12 = arith.constant dense<0.000000e+00> : vector<16x128xf32>
    %16 = tpu.matmul %14, %15, %cst_12 {dimension_numbers = #tpu.dot_dimension_numbers<[1], [0], [0], [1], [0, 0, 1, 1], [], []>} : vector<16x128xf32>, vector<128x128xf32>, vector<16x128xf32> -> vector<16x128xf32>
    %c0_13 = arith.constant 0 : index
    %c0_14 = arith.constant 0 : index
    %17 = vector.load %arg5[%c0_13, %c0_14] : memref<16x128xf32, #tpu.memory_space<vmem>>, vector<16x128xf32>
    tpu.vector_store %arg5[%c0_13, %c0_14], %16 {strides = array<i32>} : memref<16x128xf32, #tpu.memory_space<vmem>>, vector<16x128xf32>,
    return
  }
  func.func @transform_0(%arg0: i32) -> (i32, i32) {
    %c0_i32 = arith.constant 0 : i32
    %c0_i32_0 = arith.constant 0 : i32
    return %arg0, %c0_i32 : i32, i32
  }
  func.func @transform_1(%arg0: i32) -> (i32, i32) {
    %c0_i32 = arith.constant 0 : i32
    %c0_i32_0 = arith.constant 0 : i32
    %c0_i32_1 = arith.constant 0 : i32
    return %c0_i32, %c0_i32_0 : i32, i32
  }
  func.func @transform_2(%arg0: i32) -> (i32, i32) {
    %c0_i32 = arith.constant 0 : i32
    %c0_i32_0 = arith.constant 0 : i32
    %c0_i32_1 = arith.constant 0 : i32
    return %c0_i32, %c0_i32_0 : i32, i32
  }
  func.func @transform_3(%arg0: i32) -> (i32, i32) {
    %c0_i32 = arith.constant 0 : i32
    %c0_i32_0 = arith.constant 0 : i32
    %c0_i32_1 = arith.constant 0 : i32
    return %c0_i32, %c0_i32_0 : i32, i32
  }
  func.func @transform_4(%arg0: i32) -> (i32, i32) {
    %c0_i32 = arith.constant 0 : i32
    %c0_i32_0 = arith.constant 0 : i32
    return %arg0, %c0_i32 : i32, i32
  }
}

</mosaic_0001>

<llo_original>
// kernel: tpu_custom_call.1
$region0: #{tpu_custom_call.1}
  #allocation0 [shape = 'u32[]', space=smem, size = 0x4, offset = 0x4, fixed_abs, tag = 'smem constant byte address 0x4 - core index']
  #allocation1 [shape = 'u32[72,128]{1,0:T(1,128)}', space=vmem, size = 0x9000, scoped, tag = 'internal scratch']
  %s0 = inlined_call_operand.hbm [shape: f32[16,128], index: 0, kind: input, shape index: {}]
  %s1 = inlined_call_operand.hbm [shape: f32[128,128], index: 1, kind: input, shape index: {}]
  %s2 = inlined_call_operand.hbm [shape: f32[128,128], index: 2, kind: input, shape index: {}]
  %s3 = inlined_call_operand.hbm [shape: f32[128,128], index: 3, kind: input, shape index: {}]
  %s4 = inlined_call_operand.hbm [shape: f32[16,128], index: 4, kind: output, shape index: {}]
  %s5 = sld [smem:[#allocation0]]
  $region42: #{tpu_custom_call.1} parent=0
    _
  %s7 = ssub.s32 1, %s5
  %s8 = scalar_select 0, %s7, %s5
  $region1: #{tpu_custom_call.1} parent=0
    #allocation2 [shape = 'u8[8192]{0}', space=vmem, size = 0x2000, scoped, tag = 'input window, operand 0, single buffered']
    #allocation3 [shape = 's32[1]{0}', space=sflag, size = 0x4, scoped, tag = 'scoped memory for tpu_custom_call.1']
    #allocation4 [shape = 's32[1]{0}', space=sflag, size = 0x4, scoped, tag = 'scoped memory for tpu_custom_call.1']
    #allocation5 [shape = 'u8[65536]{0}', space=vmem, size = 0x10000, scoped, tag = 'input window, operand 1, single buffered']
    #allocation6 [shape = 's32[1]{0}', space=sflag, size = 0x4, scoped, tag = 'scoped memory for tpu_custom_call.1']
    #allocation7 [shape = 'u8[65536]{0}', space=vmem, size = 0x10000, scoped, tag = 'input window, operand 2, single buffered']
    #allocation8 [shape = 'u8[65536]{0}', space=vmem, size = 0x10000, scoped, tag = 'input window, operand 3, single buffered']
    #allocation9 [shape = 's32[1]{0}', space=sflag, size = 0x4, scoped, tag = 'scoped memory for tpu_custom_call.1']
    #allocation10 [shape = 'u8[8192]{0}', space=vmem, size = 0x2000, scoped, tag = 'output window, operand 0, single buffered']
    %9 = vsyncpa [#allocation3], 0
    %10 = vsyncpa [#allocation6], 0
    %11 = vsyncpa [#allocation9], 0
    %12 = vsyncpa [#allocation4], 0
    // Predicated region
    $region2: #{tpu_custom_call.1} parent=1 // pred_check
      _
    $region3: #{tpu_custom_call.1} parent=1 // pred_check_branch
      %14 = sbr.rel (0) target = $region5
    $region4: #{tpu_custom_call.1} parent=1 // pred_region
      %16 = vsyncadd [#allocation3], 0
      %s17 = sshll.u32 %s0, 4
      %s18 = int_to_ptr.hbm [resolvable:$true] %s17
      %s19 = sshll.u32 [#allocation2], 4
      %s20 = int_to_ptr.vmem [resolvable:$true] %s19
      %25 = dma.hbm_to_vmem [thread:$0]  %s18, 256, %s20, [#allocation3], 128, 128, 8
    $region5: #{tpu_custom_call.1} parent=1 // pred_fallthru
      _
    // Predicated region
    $region6: #{tpu_custom_call.1} parent=1 // pred_check
      _
    $region7: #{tpu_custom_call.1} parent=1 // pred_check_branch
      %27 = sbr.rel (0) target = $region9
    $region8: #{tpu_custom_call.1} parent=1 // pred_region
      %29 = vsyncadd [#allocation6], 0
      %s30 = sshll.u32 %s1, 4
      %s31 = int_to_ptr.hbm [resolvable:$true] %s30
      %s32 = sshll.u32 [#allocation5], 4
      %s33 = int_to_ptr.vmem [resolvable:$true] %s32
      %38 = dma.hbm_to_vmem [thread:$0]  %s31, 2048, %s33, [#allocation6], 128, 128, 8
    $region9: #{tpu_custom_call.1} parent=1 // pred_fallthru
      _
    // Predicated region
    $region10: #{tpu_custom_call.1} parent=1 // pred_check
      _
    $region11: #{tpu_custom_call.1} parent=1 // pred_check_branch
      %40 = sbr.rel (0) target = $region13
    $region12: #{tpu_custom_call.1} parent=1 // pred_region
      %42 = vsyncadd [#allocation6], 0
      %s43 = sshll.u32 %s2, 4
      %s44 = int_to_ptr.hbm [resolvable:$true] %s43
      %s45 = sshll.u32 [#allocation7], 4
      %s46 = int_to_ptr.vmem [resolvable:$true] %s45
      %51 = dma.hbm_to_vmem [thread:$0]  %s44, 2048, %s46, [#allocation6], 128, 128, 8
    $region13: #{tpu_custom_call.1} parent=1 // pred_fallthru
      _
    // Predicated region
    $region14: #{tpu_custom_call.1} parent=1 // pred_check
      _
    $region15: #{tpu_custom_call.1} parent=1 // pred_check_branch
      %53 = sbr.rel (0) target = $region17
    $region16: #{tpu_custom_call.1} parent=1 // pred_region
      %55 = vsyncadd [#allocation9], 0
      %s56 = sshll.u32 %s3, 4
      %s57 = int_to_ptr.hbm [resolvable:$true] %s56
      %s58 = sshll.u32 [#allocation8], 4
      %s59 = int_to_ptr.vmem [resolvable:$true] %s58
      %64 = dma.hbm_to_vmem [thread:$0]  %s57, 2048, %s59, [#allocation9], 128, 128, 8
    $region17: #{tpu_custom_call.1} parent=1 // pred_fallthru
      _
    // Predicated region
    $region18: #{tpu_custom_call.1} parent=1 // pred_check
      _
    $region19: #{tpu_custom_call.1} parent=1 // pred_check_branch
      %66 = sbr.rel (0) target = $region21
    $region20: #{tpu_custom_call.1} parent=1 // pred_region
      %68 = dma.done [#allocation3], 256
    $region21: #{tpu_custom_call.1} parent=1 // pred_fallthru
      _
    // Predicated region
    $region22: #{tpu_custom_call.1} parent=1 // pred_check
      _
    $region23: #{tpu_custom_call.1} parent=1 // pred_check_branch
      %70 = sbr.rel (0) target = $region25
    $region24: #{tpu_custom_call.1} parent=1 // pred_region
      %72 = dma.done [#allocation6], 2048
    $region25: #{tpu_custom_call.1} parent=1 // pred_fallthru
      _
    // Predicated region
    $region26: #{tpu_custom_call.1} parent=1 // pred_check
      _
    $region27: #{tpu_custom_call.1} parent=1 // pred_check_branch
      %74 = sbr.rel (0) target = $region29
    $region28: #{tpu_custom_call.1} parent=1 // pred_region
      %76 = dma.done [#allocation6], 2048
    $region29: #{tpu_custom_call.1} parent=1 // pred_fallthru
      _
    // Predicated region
    $region30: #{tpu_custom_call.1} parent=1 // pred_check
      _
    $region31: #{tpu_custom_call.1} parent=1 // pred_check_branch
      %78 = sbr.rel (0) target = $region33
    $region32: #{tpu_custom_call.1} parent=1 // pred_region
      %80 = dma.done [#allocation9], 2048
    $region33: #{tpu_custom_call.1} parent=1 // pred_fallthru
      _
    %v81 = vld [vmem:[#allocation2] sm:$0xff]
    %v82 = vld [vmem:[#allocation2 + $0x8] sm:$0xff]
    %v83 = vld [vmem:[#allocation5] sm:$0xff]
    %v84 = vld [vmem:[#allocation5 + $0x8] sm:$0xff]
    %v85 = vld [vmem:[#allocation5 + $0x10] sm:$0xff]
    %v86 = vld [vmem:[#allocation5 + $0x18] sm:$0xff]
    %v87 = vld [vmem:[#allocation5 + $0x20] sm:$0xff]
    %v88 = vld [vmem:[#allocation5 + $0x28] sm:$0xff]
    %v89 = vld [vmem:[#allocation5 + $0x30] sm:$0xff]
    %v90 = vld [vmem:[#allocation5 + $0x38] sm:$0xff]
    %v91 = vld [vmem:[#allocation5 + $0x40] sm:$0xff]
    %v92 = vld [vmem:[#allocation5 + $0x48] sm:$0xff]
    %v93 = vld [vmem:[#allocation5 + $0x50] sm:$0xff]
    %v94 = vld [vmem:[#allocation5 + $0x58] sm:$0xff]
    %v95 = vld [vmem:[#allocation5 + $0x60] sm:$0xff]
    %v96 = vld [vmem:[#allocation5 + $0x68] sm:$0xff]
    %v97 = vld [vmem:[#allocation5 + $0x70] sm:$0xff]
    %v98 = vld [vmem:[#allocation5 + $0x78] sm:$0xff]
    %99 = vmatpush.msra.mxu0 %v98
    %100 = vmatpush.msra.mxu0 %v97
    %101 = vmatpush.msra.mxu0 %v96
    %102 = vmatpush.msra.mxu0 %v95
    %103 = vmatpush.msra.mxu0 %v94
    %104 = vmatpush.msra.mxu0 %v93
    %105 = vmatpush.msra.mxu0 %v92
    %106 = vmatpush.msra.mxu0 %v91
    %107 = vmatpush.msra.mxu0 %v90
    %108 = vmatpush.msra.mxu0 %v89
    %109 = vmatpush.msra.mxu0 %v88
    %110 = vmatpush.msra.mxu0 %v87
    %111 = vmatpush.msra.mxu0 %v86
    %112 = vmatpush.msra.mxu0 %v85
    %113 = vmatpush.msra.mxu0 %v84
    %114 = vmatpush.msra.mxu0 %v83
    %115 = vmatmul.f32.gmra.mxu0 %v81
    %v116 = vpop.f32.mrf.mxu0
    %v117 = vadd.f32 0.0, %v116
    %118 = vmatmul.f32.gmra.mxu0 %v82
    %v119 = vpop.f32.mrf.mxu0
    %v120 = vadd.f32 0.0, %v119
    %121 = vdwg.mxu0
    %vm122 = vcmp.gt.f32.partialorder %v117, 0.0
    %vm123 = vcmp.gt.f32.partialorder %v120, 0.0
    %v124 = vmul.f32 %v117, 0.01
    %v125 = vmul.f32 %v120, 0.01
    %v126 = vsel %vm122, %v117, %v124
    %v127 = vsel %vm123, %v120, %v125
    %v128 = vld [vmem:[#allocation7] sm:$0xff]
    %v129 = vld [vmem:[#allocation7 + $0x8] sm:$0xff]
    %v130 = vld [vmem:[#allocation7 + $0x10] sm:$0xff]
    %v131 = vld [vmem:[#allocation7 + $0x18] sm:$0xff]
    %v132 = vld [vmem:[#allocation7 + $0x20] sm:$0xff]
    %v133 = vld [vmem:[#allocation7 + $0x28] sm:$0xff]
    %v134 = vld [vmem:[#allocation7 + $0x30] sm:$0xff]
    %v135 = vld [vmem:[#allocation7 + $0x38] sm:$0xff]
    %v136 = vld [vmem:[#allocation7 + $0x40] sm:$0xff]
    %v137 = vld [vmem:[#allocation7 + $0x48] sm:$0xff]
    %v138 = vld [vmem:[#allocation7 + $0x50] sm:$0xff]
    %v139 = vld [vmem:[#allocation7 + $0x58] sm:$0xff]
    %v140 = vld [vmem:[#allocation7 + $0x60] sm:$0xff]
    %v141 = vld [vmem:[#allocation7 + $0x68] sm:$0xff]
    %v142 = vld [vmem:[#allocation7 + $0x70] sm:$0xff]
    %v143 = vld [vmem:[#allocation7 + $0x78] sm:$0xff]
    %144 = vmatpush.msra.mxu0 %v143
    %145 = vmatpush.msra.mxu0 %v142
    %146 = vmatpush.msra.mxu0 %v141
    %147 = vmatpush.msra.mxu0 %v140
    %148 = vmatpush.msra.mxu0 %v139
    %149 = vmatpush.msra.mxu0 %v138
    %150 = vmatpush.msra.mxu0 %v137
    %151 = vmatpush.msra.mxu0 %v136
    %152 = vmatpush.msra.mxu0 %v135
    %153 = vmatpush.msra.mxu0 %v134
    %154 = vmatpush.msra.mxu0 %v133
    %155 = vmatpush.msra.mxu0 %v132
    %156 = vmatpush.msra.mxu0 %v131
    %157 = vmatpush.msra.mxu0 %v130
    %158 = vmatpush.msra.mxu0 %v129
    %159 = vmatpush.msra.mxu0 %v128
    %160 = vmatmul.f32.gmra.mxu0 %v126
    %v161 = vpop.f32.mrf.mxu0
    %v162 = vadd.f32 0.0, %v161
    %163 = vmatmul.f32.gmra.mxu0 %v127
    %v164 = vpop.f32.mrf.mxu0
    %v165 = vadd.f32 0.0, %v164
    %166 = vdwg.mxu0
    %vm167 = vcmp.gt.f32.partialorder %v162, 0.0
    %vm168 = vcmp.gt.f32.partialorder %v165, 0.0
    %v169 = vmul.f32 %v162, 0.01
    %v170 = vmul.f32 %v165, 0.01
    %v171 = vsel %vm167, %v162, %v169
    %v172 = vsel %vm168, %v165, %v170
    %v173 = vld [vmem:[#allocation8] sm:$0xff]
    %v174 = vld [vmem:[#allocation8 + $0x8] sm:$0xff]
    %v175 = vld [vmem:[#allocation8 + $0x10] sm:$0xff]
    %v176 = vld [vmem:[#allocation8 + $0x18] sm:$0xff]
    %v177 = vld [vmem:[#allocation8 + $0x20] sm:$0xff]
    %v178 = vld [vmem:[#allocation8 + $0x28] sm:$0xff]
    %v179 = vld [vmem:[#allocation8 + $0x30] sm:$0xff]
    %v180 = vld [vmem:[#allocation8 + $0x38] sm:$0xff]
    %v181 = vld [vmem:[#allocation8 + $0x40] sm:$0xff]
    %v182 = vld [vmem:[#allocation8 + $0x48] sm:$0xff]
    %v183 = vld [vmem:[#allocation8 + $0x50] sm:$0xff]
    %v184 = vld [vmem:[#allocation8 + $0x58] sm:$0xff]
    %v185 = vld [vmem:[#allocation8 + $0x60] sm:$0xff]
    %v186 = vld [vmem:[#allocation8 + $0x68] sm:$0xff]
    %v187 = vld [vmem:[#allocation8 + $0x70] sm:$0xff]
    %v188 = vld [vmem:[#allocation8 + $0x78] sm:$0xff]
    %189 = vmatpush.msra.mxu0 %v188
    %190 = vmatpush.msra.mxu0 %v187
    %191 = vmatpush.msra.mxu0 %v186
    %192 = vmatpush.msra.mxu0 %v185
    %193 = vmatpush.msra.mxu0 %v184
    %194 = vmatpush.msra.mxu0 %v183
    %195 = vmatpush.msra.mxu0 %v182
    %196 = vmatpush.msra.mxu0 %v181
    %197 = vmatpush.msra.mxu0 %v180
    %198 = vmatpush.msra.mxu0 %v179
    %199 = vmatpush.msra.mxu0 %v178
    %200 = vmatpush.msra.mxu0 %v177
    %201 = vmatpush.msra.mxu0 %v176
    %202 = vmatpush.msra.mxu0 %v175
    %203 = vmatpush.msra.mxu0 %v174
    %204 = vmatpush.msra.mxu0 %v173
    %205 = vmatmul.f32.gmra.mxu0 %v171
    %v206 = vpop.f32.mrf.mxu0
    %v207 = vadd.f32 0.0, %v206
    %208 = vmatmul.f32.gmra.mxu0 %v172
    %v209 = vpop.f32.mrf.mxu0
    %v210 = vadd.f32 0.0, %v209
    %211 = vdwg.mxu0
    %212 = vst [vmem:[#allocation10] sm:$0xff] %v207
    %213 = vst [vmem:[#allocation10 + $0x8] sm:$0xff] %v210
    // Predicated region
    $region34: #{tpu_custom_call.1} parent=1 // pred_check
      _
    $region35: #{tpu_custom_call.1} parent=1 // pred_check_branch
      %215 = sbr.rel (0) target = $region37
    $region36: #{tpu_custom_call.1} parent=1 // pred_region
      %217 = vsyncadd [#allocation4], 0
      %s218 = sshll.u32 [#allocation10], 4
      %s219 = int_to_ptr.vmem [resolvable:$true] %s218
      %s220 = sshll.u32 %s4, 4
      %s221 = int_to_ptr.hbm [resolvable:$true] %s220
      %226 = dma.vmem_to_hbm [thread:$0]  %s219, 256, %s221, [#allocation4], 128, 128, 8
    $region37: #{tpu_custom_call.1} parent=1 // pred_fallthru
      _
    // Predicated region
    $region38: #{tpu_custom_call.1} parent=1 // pred_check
      _
    $region39: #{tpu_custom_call.1} parent=1 // pred_check_branch
      %228 = sbr.rel (0) target = $region41
    $region40: #{tpu_custom_call.1} parent=1 // pred_region
      %230 = dma.done [#allocation4], 256
    $region41: #{tpu_custom_call.1} parent=1 // pred_fallthru
      _
    %231 = vsyncpa [#allocation3], 1
    %232 = vsyncpa [#allocation6], 1
    %233 = vsyncpa [#allocation9], 1
    %234 = vsyncpa [#allocation4], 1

</llo_original>
